<compile_context>
chip_gen: v6e
topology: v6e:2x2x1
jax: 0.10.0
libtpu: 0.0.40
codegen_flags: <defaults>
</compile_context>

<pallas_src>
import functools
import math

import jax
import jax.numpy as jnp
from jax.experimental import pallas as pl
from jax.experimental.pallas import tpu as pltpu


def _xent_kernel(lp_ref, tgt_ref, out_ref, *, pad_index, smoothing, vocab_size):
    """One row-tile -> one (1, 8, 128) partial-sum block (scalar in [0,0,0])."""
    lp = lp_ref[...].astype(jnp.float32)          # (tile_n, V) log-probs
    tgt = tgt_ref[...]                            # (tile_n, 1) int32 targets
    tile_n, V = lp.shape

    col = jax.lax.broadcasted_iota(jnp.int32, (tile_n, V), 1)
    is_tgt = col == tgt                           # one-hot of target column
    non_pad = tgt != pad_index                    # (tile_n, 1) valid-row mask
    # (padded / out-of-range rows carry pad_index targets -> non_pad == False,
    #  and every use of lp below is gated by a select, so unspecified data in a
    #  trailing partial block contributes exactly 0)

    if smoothing <= 0.0:
        # NLLLoss(ignore_index=pad, reduction='sum')
        partial = -jnp.sum(jnp.where(is_tgt & non_pad, lp, 0.0))
    else:
        # KLDivLoss(reduction='sum') vs smoothed targets, closed form.
        u = smoothing / (vocab_size - 2)
        c_row = ((1.0 - smoothing) * math.log(1.0 - smoothing)
                 + (vocab_size - 2) * u * math.log(u))     # per-valid-row const
        w = jnp.where(is_tgt, 1.0 - smoothing, u)          # smoothed weights
        w = jnp.where(col == pad_index, 0.0, w)            # zero pad column
        w = jnp.where(non_pad, w, 0.0)                     # zero padded rows
        lp_m = jnp.where(non_pad, lp, 0.0)                 # discard OOB garbage
        n_valid = jnp.sum(non_pad.astype(jnp.float32))
        partial = n_valid * c_row - jnp.sum(w * lp_m)

    # Lane-dense partial-sum block: scalar at [0,0,0], zeros elsewhere.
    sub = jax.lax.broadcasted_iota(jnp.int32, (1, 8, 128), 1)
    lane = jax.lax.broadcasted_iota(jnp.int32, (1, 8, 128), 2)
    out_ref[...] = jnp.where((sub == 0) & (lane == 0), partial, 0.0)


def xent_loss_pallas(log_probs, targets, *, pad_index, smoothing, tile_n=None):
    """log_probs: (..., V) float log-probs (f32 or bf16); targets: (...) ints."""
    V = log_probs.shape[-1]
    lp = log_probs.reshape(-1, V)                 # keep HBM dtype (bf16 ok)
    tg = targets.reshape(-1).astype(jnp.int32)
    N = lp.shape[0]
    itemsize = jnp.dtype(lp.dtype).itemsize

    if tile_n is None:
        # ~4 MiB of log-probs per pipeline buffer (double-buffered -> ~8 MiB),
        # comfortably under the 64 MiB physical VMEM of v7x and big enough to
        # amortize the ~0.35us per-grid-step overhead on all generations.
        target_bytes = 4 << 20
        rows = max(8, (target_bytes // (V * itemsize)) // 8 * 8)
        rows = min(rows, 2048)
        n_up = ((N + 7) // 8) * 8                 # don't over-allocate tiny inputs
        tile_n = max(8, min(rows, n_up))
    assert tile_n % 8 == 0

    num_tiles = int(pl.cdiv(N, tile_n))
    # Only the cheap target vector is padded (pad_index -> contributes 0);
    # the full [N, V] log_probs array is NOT copied/padded.
    Np = num_tiles * tile_n
    if Np != N:
        tg = jnp.pad(tg, (0, Np - N), constant_values=pad_index)
    tg2 = tg.reshape(-1, 1)

    kernel = functools.partial(
        _xent_kernel, pad_index=int(pad_index), smoothing=float(smoothing),
        vocab_size=V)

    # Double-buffered log-prob tile + targets + output blocks + headroom.
    vmem_bytes = (2 * tile_n * V * itemsize + 2 * tile_n * 4
                  + 2 * 8 * 128 * 4 + (4 << 20))
    vmem_bytes = int(min(max(vmem_bytes, 16 << 20), 32 << 20))

    partials = pl.pallas_call(
        kernel,
        out_shape=jax.ShapeDtypeStruct((num_tiles, 8, 128), jnp.float32),
        grid=(num_tiles,),
        in_specs=[
            pl.BlockSpec((tile_n, V), lambda i: (i, 0)),   # log-prob row tile
            pl.BlockSpec((tile_n, 1), lambda i: (i, 0)),   # target column
        ],
        out_specs=pl.BlockSpec((1, 8, 128), lambda i: (i, 0, 0)),
        compiler_params=pltpu.CompilerParams(
            dimension_semantics=("parallel",),
            vmem_limit_bytes=vmem_bytes),
    )(lp, tg2)
    return jnp.sum(partials)


# ---- pure-JAX references (for correctness check) ----------------------------
def _ref_nll(log_probs, targets, pad_index):
    V = log_probs.shape[-1]
    lp = log_probs.reshape(-1, V).astype(jnp.float32)
    tg = targets.reshape(-1)
    picked = jnp.take_along_axis(lp, tg[:, None], axis=1)[:, 0]
    mask = tg != pad_index
    return -jnp.sum(jnp.where(mask, picked, 0.0))


def _ref_kl(log_probs, targets, pad_index, smoothing):
    V = log_probs.shape[-1]
    lp = log_probs.reshape(-1, V).astype(jnp.float32)
    tg = targets.reshape(-1)
    N = lp.shape[0]
    u = smoothing / (V - 2)
    p = jnp.full((N, V), u, dtype=jnp.float32)
    p = p.at[jnp.arange(N), tg].set(1.0 - smoothing)
    p = p.at[:, pad_index].set(0.0)
    p = jnp.where((tg == pad_index)[:, None], 0.0, p)
    term = jnp.where(p > 0.0, p * (jnp.log(p) - lp), 0.0)
    return jnp.sum(term)


if __name__ == "__main__":
    key = jax.random.PRNGKey(0)
    PAD = 1
    SMOOTH = 0.1

    def make_case(key, B, L, V):
        k1, k2, k3 = jax.random.split(key, 3)
        logits = jax.random.normal(k1, (B, L, V), dtype=jnp.float32)
        log_probs = jax.nn.log_softmax(logits, axis=-1)
        targets = jax.random.randint(k2, (B, L), 0, V, dtype=jnp.int32)
        pad_mask = jax.random.bernoulli(k3, 0.25, (B, L))
        targets = jnp.where(pad_mask, PAD, targets)
        return log_probs, targets

    kA, kB = jax.random.split(key)
    # Case A: batch=2, seq=8, vocab=512 (row count multiple of 8).
    lpA, tgA = make_case(kA, 2, 8, 512)
    # Case B: batch=3, seq=7, vocab=384 (row count NOT a multiple of the tile;
    # exercises the in-kernel masking of the trailing partial block).
    lpB, tgB = make_case(kB, 3, 7, 384)

    results = []
    for lp_in, tg_in in ((lpA, tgA), (lpB, tgB)):
        # smoothing == 0.0 -> NLLLoss(ignore_index=pad, reduction='sum')
        loss_nll = xent_loss_pallas(lp_in, tg_in, pad_index=PAD, smoothing=0.0)
        ref_nll = _ref_nll(lp_in, tg_in, PAD)
        # smoothing > 0 -> KLDivLoss(reduction='sum') vs smoothed distribution
        loss_kl = xent_loss_pallas(lp_in, tg_in, pad_index=PAD, smoothing=SMOOTH)
        ref_kl = _ref_kl(lp_in, tg_in, PAD, SMOOTH)
        results.append((loss_nll, ref_nll, loss_kl, ref_kl))

    jax.block_until_ready(results)

    for loss_nll, ref_nll, loss_kl, ref_kl in results:
        assert jnp.allclose(loss_nll, ref_nll, rtol=1e-5, atol=1e-3), (loss_nll, ref_nll)
        assert jnp.allclose(loss_kl, ref_kl, rtol=1e-5, atol=1e-3), (loss_kl, ref_kl)

    print("KERNEL_OK")
</pallas_src>

<mosaic_0001>
module attributes {stable_mosaic.version = 11 : i64} {
  func.func @_xent_kernel(%arg0: i32, %arg1: memref<16x512xf32, #tpu.memory_space<vmem>>, %arg2: memref<16x1xi32, #tpu.memory_space<vmem>>, %arg3: memref<1x8x128xf32, #tpu.memory_space<vmem>>) attributes {dimension_semantics = [#tpu.dimension_semantics<parallel>], iteration_bounds = array<i64: 1>, scalar_prefetch = 0 : i64, scratch_operands = 0 : i64, tpu.core_type = #tpu.core_type<tc>, window_params = [{transform_indices = @transform_0, window_bounds = array<i64: 16, 512>}, {transform_indices = @transform_1, window_bounds = array<i64: 16, 1>}, {transform_indices = @transform_2, window_bounds = array<i64: 1, 8, 128>}]} {
    %c0 = arith.constant 0 : index
    %c0_0 = arith.constant 0 : index
    %0 = vector.load %arg1[%c0, %c0_0] : memref<16x512xf32, #tpu.memory_space<vmem>>, vector<16x512xf32>
    %c0_1 = arith.constant 0 : index
    %c0_2 = arith.constant 0 : index
    %1 = vector.load %arg2[%c0_1, %c0_2] : memref<16x1xi32, #tpu.memory_space<vmem>>, vector<16x1xi32>
    %2 = tpu.iota {dimensions = array<i32: 1>} : vector<16x512xi32>
    %3 = vector.broadcast %1 : vector<16x1xi32> to vector<16x512xi32>
    %4 = arith.cmpi eq, %2, %3 : vector<16x512xi32>
    %c1_i32 = arith.constant 1 : i32
    %5 = vector.broadcast %c1_i32 : i32 to vector<16x1xi32>
    %6 = arith.cmpi ne, %1, %5 : vector<16x1xi32>
    %7 = vector.broadcast %6 : vector<16x1xi1> to vector<16x512xi1>
    %8 = arith.andi %4, %7 : vector<16x512xi1>
    %cst = arith.constant 0.000000e+00 : f32
    %9 = vector.broadcast %cst : f32 to vector<16x512xf32>
    %10 = arith.select %8, %0, %9 : vector<16x512xi1>, vector<16x512xf32>
    %11 = vector.shape_cast %10 : vector<16x512xf32> to vector<1x16x512xf32>
    %cst_3 = arith.constant dense<0.000000e+00> : vector<1xf32>
    %12 = vector.multi_reduction <add>, %11, %cst_3 [1, 2] : vector<1x16x512xf32> to vector<1xf32>
    %13 = vector.shape_cast %12 : vector<1xf32> to vector<1x1x1xf32>
    %14 = vector.extract %13[0, 0, 0] : f32 from vector<1x1x1xf32>
    %cst_4 = arith.constant 0.000000e+00 : f32
    %15 = arith.subf %cst_4, %14 : f32
    %16 = tpu.iota {dimensions = array<i32: 1>} : vector<1x8x128xi32>
    %17 = tpu.iota {dimensions = array<i32: 2>} : vector<1x8x128xi32>
    %c0_i32 = arith.constant 0 : i32
    %18 = vector.broadcast %c0_i32 : i32 to vector<1x8x128xi32>
    %19 = arith.cmpi eq, %16, %18 : vector<1x8x128xi32>
    %c0_i32_5 = arith.constant 0 : i32
    %20 = vector.broadcast %c0_i32_5 : i32 to vector<1x8x128xi32>
    %21 = arith.cmpi eq, %17, %20 : vector<1x8x128xi32>
    %22 = arith.andi %19, %21 : vector<1x8x128xi1>
    %cst_6 = arith.constant 0.000000e+00 : f32
    %23 = vector.broadcast %15 : f32 to vector<1x8x128xf32>
    %24 = vector.broadcast %cst_6 : f32 to vector<1x8x128xf32>
    %25 = arith.select %22, %23, %24 : vector<1x8x128xi1>, vector<1x8x128xf32>
    %c0_7 = arith.constant 0 : index
    %c0_8 = arith.constant 0 : index
    %c0_9 = arith.constant 0 : index
    %26 = vector.load %arg3[%c0_7, %c0_8, %c0_9] : memref<1x8x128xf32, #tpu.memory_space<vmem>>, vector<1x8x128xf32>
    tpu.vector_store %arg3[%c0_7, %c0_8, %c0_9], %25 {strides = array<i32>} : memref<1x8x128xf32, #tpu.memory_space<vmem>>, vector<1x8x128xf32>,
    return
  }
  func.func @transform_0(%arg0: i32) -> (i32, i32) {
    %c0_i32 = arith.constant 0 : i32
    %c0_i32_0 = arith.constant 0 : i32
    return %arg0, %c0_i32 : i32, i32
  }
  func.func @transform_1(%arg0: i32) -> (i32, i32) {
    %c0_i32 = arith.constant 0 : i32
    %c0_i32_0 = arith.constant 0 : i32
    return %arg0, %c0_i32 : i32, i32
  }
  func.func @transform_2(%arg0: i32) -> (i32, i32, i32) {
    %c0_i32 = arith.constant 0 : i32
    %c0_i32_0 = arith.constant 0 : i32
    %c0_i32_1 = arith.constant 0 : i32
    return %arg0, %c0_i32, %c0_i32_0 : i32, i32, i32
  }
}

</mosaic_0001>

<llo_original>
// kernel: tpu_custom_call.1
$region0: #{tpu_custom_call.1}
  #allocation0 [shape = 'u32[]', space=smem, size = 0x4, offset = 0x4, fixed_abs, tag = 'smem constant byte address 0x4 - core index']
  #allocation1 [shape = 'u32[144,128]{1,0:T(1,128)}', space=vmem, size = 0x12000, scoped, tag = 'internal scratch']
  %s0 = inlined_call_operand.hbm [shape: f32[16,512], index: 0, kind: input, shape index: {}]
  %s1 = inlined_call_operand.vmem [shape: s32[16,1], index: 1, kind: input, shape index: {}]
  %s2 = inlined_call_operand.hbm [shape: f32[1,8,128], index: 2, kind: output, shape index: {}]
  %s3 = sld [smem:[#allocation0]]
  $region22: #{tpu_custom_call.1} parent=0
    _
  %s5 = ssub.s32 1, %s3
  %s6 = scalar_select 0, %s5, %s3
  $region1: #{tpu_custom_call.1} parent=0
    #allocation2 [shape = 'u8[32768]{0}', space=vmem, size = 0x8000, scoped, tag = 'input window, operand 0, single buffered']
    #allocation3 [shape = 's32[1]{0}', space=sflag, size = 0x4, scoped, tag = 'scoped memory for tpu_custom_call.1']
    #allocation4 [shape = 's32[1]{0}', space=sflag, size = 0x4, scoped, tag = 'scoped memory for tpu_custom_call.1']
    #allocation5 [shape = 'u8[4096]{0}', space=vmem, size = 0x1000, scoped, tag = 'output window, operand 0, single buffered']
    %7 = vsyncpa [#allocation3], 0
    %8 = vsyncpa [#allocation4], 0
    // Predicated region
    $region2: #{tpu_custom_call.1} parent=1 // pred_check
      _
    $region3: #{tpu_custom_call.1} parent=1 // pred_check_branch
      %10 = sbr.rel (0) target = $region5
    $region4: #{tpu_custom_call.1} parent=1 // pred_region
      %s12 = ssub.s32 1024, 1024
      %13 = vsyncadd [#allocation3], %s12
      %s14 = sshll.u32 [#allocation2], 4
      %s15 = int_to_ptr.vmem [resolvable:$true] %s14
      %20 = dma.hbm_to_vmem [thread:$0]  %s0, 1024, %s15, [#allocation3], 512, 512, 32
    $region5: #{tpu_custom_call.1} parent=1 // pred_fallthru
      _
    // Predicated region
    $region6: #{tpu_custom_call.1} parent=1 // pred_check
      _
    $region7: #{tpu_custom_call.1} parent=1 // pred_check_branch
      %22 = sbr.rel (0) target = $region9
    $region8: #{tpu_custom_call.1} parent=1 // pred_region
      _
    $region9: #{tpu_custom_call.1} parent=1 // pred_fallthru
      _
    // Predicated region
    $region10: #{tpu_custom_call.1} parent=1 // pred_check
      _
    $region11: #{tpu_custom_call.1} parent=1 // pred_check_branch
      %24 = sbr.rel (0) target = $region13
    $region12: #{tpu_custom_call.1} parent=1 // pred_region
      %25 = dma.done [#allocation3], 1024
    $region13: #{tpu_custom_call.1} parent=1 // pred_fallthru
      _
    %v26 = vld [vmem:[#allocation2] sm:$0xff]
    %v27 = vld [vmem:[#allocation2 + $0x8] sm:$0xff]
    %v28 = vld [vmem:[#allocation2 + $0x10] sm:$0xff]
    %v29 = vld [vmem:[#allocation2 + $0x18] sm:$0xff]
    %v30 = vld [vmem:[#allocation2 + $0x20] sm:$0xff]
    %v31 = vld [vmem:[#allocation2 + $0x28] sm:$0xff]
    %v32 = vld [vmem:[#allocation2 + $0x30] sm:$0xff]
    %v33 = vld [vmem:[#allocation2 + $0x38] sm:$0xff]
    %v34 = vld [vmem:[%s1] sm:$0xff]
    %v35 = vld [vmem:[%s1 + $0x8] sm:$0xff]
    %v36 = vlaneseq
    %v37 = vand.u32 %v36, 127
    %v38 = vadd.s32 %v37, 128
    %v39 = vadd.s32 %v37, 256
    %v40 = vadd.s32 %v37, 384
    %41 = vset.pattern.permute.xlu0 0
    %42 = vperm.xlu0 %41, %v34
    %v43 = vpop.permute.xlu0 %42
    %44 = vset.pattern.permute.xlu0 0
    %45 = vperm.xlu0 %44, %v35
    %v46 = vpop.permute.xlu0 %45
    %vm47 = vcmp.eq.s32.totalorder %v37, %v43
    %vm48 = vcmp.eq.s32.totalorder %v38, %v43
    %vm49 = vcmp.eq.s32.totalorder %v39, %v43
    %vm50 = vcmp.eq.s32.totalorder %v40, %v43
    %vm51 = vcmp.eq.s32.totalorder %v37, %v46
    %vm52 = vcmp.eq.s32.totalorder %v38, %v46
    %vm53 = vcmp.eq.s32.totalorder %v39, %v46
    %vm54 = vcmp.eq.s32.totalorder %v40, %v46
    %vm55 = vcmp.ne.s32.totalorder %v34, 1
    %vm56 = vcmp.ne.s32.totalorder %v35, 1
    %v57 = vsel %vm55, 1, 0
    %v58 = vsel %vm56, 1, 0
    %59 = vset.pattern.permute.xlu0 0
    %60 = vperm.xlu0 %59, %v57
    %v61 = vpop.permute.xlu0 %60
    %62 = vset.pattern.permute.xlu0 0
    %63 = vperm.xlu0 %62, %v58
    %v64 = vpop.permute.xlu0 %63
    %vm65 = vcmp.eq.s32.totalorder %v61, 1
    %vm66 = vcmp.eq.s32.totalorder %v64, 1
    %vm67 = vmand %vm47, %vm65
    %vm68 = vmand %vm48, %vm65
    %vm69 = vmand %vm49, %vm65
    %vm70 = vmand %vm50, %vm65
    %vm71 = vmand %vm51, %vm66
    %vm72 = vmand %vm52, %vm66
    %vm73 = vmand %vm53, %vm66
    %vm74 = vmand %vm54, %vm66
    %v75 = vsel %vm67, %v26, 0.0
    %v76 = vsel %vm68, %v27, 0.0
    %v77 = vsel %vm69, %v28, 0.0
    %v78 = vsel %vm70, %v29, 0.0
    %v79 = vsel %vm71, %v30, 0.0
    %v80 = vsel %vm72, %v31, 0.0
    %v81 = vsel %vm73, %v32, 0.0
    %v82 = vsel %vm74, %v33, 0.0
    %v83 = vadd.f32 %v75, %v76
    %v84 = vadd.f32 %v83, %v77
    %v85 = vadd.f32 %v84, %v78
    %v86 = vadd.f32 %v85, %v79
    %v87 = vadd.f32 %v86, %v80
    %v88 = vadd.f32 %v87, %v81
    %v89 = vadd.f32 %v88, %v82
    %90 = vadd.xlane.f32.xlu0 %v89
    %v91 = vpop.xlane.xlu0 %90
    %v92 = vrot.slane %v91, 4
    %v93 = vadd.f32 %v91, %v92
    %v94 = vrot.slane %v93, 2
    %v95 = vadd.f32 %v93, %v94
    %v96 = vrot.slane %v95, 1
    %v97 = vadd.f32 %v95, %v96
    %s98 = vtos %v97
    %s99 = ssub.f32 0.0, %s98
    %v100 = vlaneseq
    %v101 = vshrl.u32 %v100, 7
    %vm102 = vcmp.eq.s32.totalorder %v101, 0
    %vm103 = vcmp.eq.s32.totalorder %v37, 0
    %vm104 = vmand %vm102, %vm103
    %v105 = vstv %s99
    %v106 = vsel %vm104, %v105, 0.0
    %107 = vst [vmem:[#allocation5] sm:$0xff] %v106
    // Predicated region
    $region14: #{tpu_custom_call.1} parent=1 // pred_check
      _
    $region15: #{tpu_custom_call.1} parent=1 // pred_check_branch
      %109 = sbr.rel (0) target = $region17
    $region16: #{tpu_custom_call.1} parent=1 // pred_region
      %s111 = ssub.s32 128, 128
      %112 = vsyncadd [#allocation4], %s111
      %s114 = sshll.u32 [#allocation5], 4
      %s115 = int_to_ptr.vmem [resolvable:$true] %s114
      %117 = dma.vmem_to_hbm [thread:$0]  %s115, 128, %s2, [#allocation4]
    $region17: #{tpu_custom_call.1} parent=1 // pred_fallthru
      _
    // Predicated region
    $region18: #{tpu_custom_call.1} parent=1 // pred_check
      _
    $region19: #{tpu_custom_call.1} parent=1 // pred_check_branch
      %119 = sbr.rel (0) target = $region21
    $region20: #{tpu_custom_call.1} parent=1 // pred_region
      %120 = dma.done [#allocation4], 128
    $region21: #{tpu_custom_call.1} parent=1 // pred_fallthru
      _
    %121 = vsyncpa [#allocation3], 1
    %122 = vsyncpa [#allocation4], 1

</llo_original>
